<compile_context>
chip_gen: v6e
topology: v6e:2x2x1
jax: 0.10.0
libtpu: 0.0.40
codegen_flags: <defaults>
</compile_context>

<pallas_src>
import functools

import jax
import jax.numpy as jnp
from jax import lax
from jax.experimental import pallas as pl
from jax.experimental.pallas import tpu as pltpu

_SEG = 128        # lane-segment width used for slab packing / alignment
_LN_EPS = 1e-5

# Row indices inside the bias / LayerNorm vector slab.
(_BQ, _BK, _BV, _BO, _LN1G, _LN1B, _B1, _B2, _LN2G, _LN2B, _BHEAD) = range(11)
_VEC_ROWS = 16    # 11 rows padded up to a sublane multiple


def _round_up(n, m):
    return ((n + m - 1) // m) * m


def _segment_offsets(hidden, ff, nc_pad):
    """Static column offsets of [wq, wk, wv, wo, w1, w_head] in the H-row slab."""
    widths = [hidden, hidden, hidden, hidden, ff, nc_pad]
    offs, cur = [], 0
    for w in widths:
        offs.append(cur)
        cur += _round_up(w, _SEG)
    return tuple(offs), cur


def init_params(key, token_size, expression_size, hidden_size, num_classes):
    """Deterministic parameter init (synthetic, not a checkpoint)."""
    ks = jax.random.split(key, 24)
    std = 0.02
    H, F = hidden_size, 4 * hidden_size

    def nrm(k, shape, s=std):
        return (s * jax.random.normal(k, shape)).astype(jnp.float32)

    return dict(
        token_emb=nrm(ks[0], (token_size, H)),
        expr_emb=nrm(ks[1], (expression_size, H)),
        wq=nrm(ks[2], (H, H)), bq=nrm(ks[3], (1, H), 0.01),
        wk=nrm(ks[4], (H, H)), bk=nrm(ks[5], (1, H), 0.01),
        wv=nrm(ks[6], (H, H)), bv=nrm(ks[7], (1, H), 0.01),
        wo=nrm(ks[8], (H, H)), bo=nrm(ks[9], (1, H), 0.01),
        ln1_g=jnp.ones((1, H), jnp.float32), ln1_b=nrm(ks[10], (1, H), 0.01),
        w1=nrm(ks[11], (H, F)), b1=nrm(ks[12], (1, F), 0.01),
        w2=nrm(ks[13], (F, H)), b2=nrm(ks[14], (1, H), 0.01),
        ln2_g=jnp.ones((1, H), jnp.float32), ln2_b=nrm(ks[15], (1, H), 0.01),
        w_fc=nrm(ks[16], (H, 1)), b_fc=nrm(ks[17], (1, 1), 0.01),
        w_cls=nrm(ks[18], (1, num_classes)),
        b_cls=nrm(ks[19], (1, num_classes), 0.01),
    )


def pack_weights(params):
    """One-time (outside the per-step jit) weight fusion + slab packing."""
    H = params["wq"].shape[0]
    F = params["w1"].shape[1]
    NC = params["w_cls"].shape[1]
    nc_pad = _round_up(NC, _SEG)
    vec_w = _round_up(max(H, F, nc_pad), _SEG)
    offs, slab_w = _segment_offsets(H, F, nc_pad)

    # fc -> mean-pool -> classifier is affine/linear/affine: fuse exactly.
    w_head = params["w_fc"] @ params["w_cls"]                    # (H, NC)
    b_head = params["b_fc"] @ params["w_cls"] + params["b_cls"]  # (1, NC)

    slab_a = jnp.zeros((H, slab_w), jnp.float32)
    for w, o in zip([params["wq"], params["wk"], params["wv"],
                     params["wo"], params["w1"], w_head], offs):
        slab_a = slab_a.at[:, o:o + w.shape[1]].set(w)

    vec = jnp.zeros((_VEC_ROWS, vec_w), jnp.float32)
    rows = [params["bq"], params["bk"], params["bv"], params["bo"],
            params["ln1_g"], params["ln1_b"], params["b1"], params["b2"],
            params["ln2_g"], params["ln2_b"], b_head]
    for i, r in enumerate(rows):
        vec = vec.at[i:i + 1, :r.shape[1]].set(r)

    return dict(
        token_emb=params["token_emb"].astype(jnp.float32),
        expr_emb=params["expr_emb"].astype(jnp.float32),
        slab_a=slab_a.astype(jnp.bfloat16),          # (H, 6*128)
        slab_w2=params["w2"].astype(jnp.bfloat16),   # (4H, H)
        slab_vec=vec,                                # (16, 128) f32
    )


def _encoder_classifier_kernel(
    x_ref,        # (TB, S, H) f32 combined embeddings (one batch tile)
    wa_ref,       # (H, 6*SEG) bf16: [wq|wk|wv|wo|w1|w_head], 128-aligned segs
    w2_ref,       # (4H, H)    bf16: FFN down
    vec_ref,      # (16, 128)  f32: biases / LayerNorm vectors (one per row)
    out_ref,      # (TB, 1, NC_pad) f32 logits (lane-dense, padded)
    *, block_batch, seq, hidden, ff, nc_pad, offs,
):
    TB, S, H, F = block_batch, seq, hidden, ff
    R = TB * S
    o_q, o_k, o_v, o_o, o_1, o_h = offs

    def vrow(i, w):                       # (1, w) f32 bias / LN vector
        return vec_ref[i:i + 1, :w]

    x = x_ref[...].astype(jnp.float32).reshape(R, H)
    xb = x.astype(jnp.bfloat16)

    # ---- fused single-head QKV: one (R,H)@(H,3*SEG) bf16 matmul. Segments
    #      are 128-lane aligned so each slice below starts at lane 0 of a
    #      vreg (no cross-lane relayout). ----
    qkv = jnp.dot(xb, wa_ref[:, o_q:o_o], preferred_element_type=jnp.float32)
    q = (qkv[:, o_q:o_q + H] + vrow(_BQ, H)).reshape(TB, S, H)
    k = (qkv[:, o_k:o_k + H] + vrow(_BK, H)).reshape(TB, S, H)
    v = (qkv[:, o_v:o_v + H] + vrow(_BV, H)).reshape(TB, S, H)

    # ---- scaled dot-product attention (per sequence, batched einsum) ----
    scale = 1.0 / (float(H) ** 0.5)
    scores = jnp.einsum("bqh,bkh->bqk", q.astype(jnp.bfloat16),
                        k.astype(jnp.bfloat16),
                        preferred_element_type=jnp.float32) * scale
    m = jnp.max(scores, axis=-1, keepdims=True)            # f32 statistics
    p = jnp.exp(scores - m)
    denom = jnp.sum(p, axis=-1, keepdims=True)
    p = p * pl.reciprocal(denom, approx=True)               # EUP vrcp

    attn = jnp.einsum("bqk,bkh->bqh", p.astype(jnp.bfloat16),
                      v.astype(jnp.bfloat16),
                      preferred_element_type=jnp.float32).reshape(R, H)
    attn = jnp.dot(attn.astype(jnp.bfloat16), wa_ref[:, o_o:o_o + H],
                   preferred_element_type=jnp.float32) + vrow(_BO, H)

    # ---- residual + LayerNorm 1 (post-norm, eps=1e-5) ----
    h = x + attn
    mu = jnp.mean(h, axis=-1, keepdims=True)
    var = jnp.mean((h - mu) ** 2, axis=-1, keepdims=True)
    h = (h - mu) * lax.rsqrt(var + _LN_EPS) * vrow(_LN1G, H) + vrow(_LN1B, H)

    # ---- feed-forward (4H, ReLU) ----
    f = jnp.dot(h.astype(jnp.bfloat16), wa_ref[:, o_1:o_1 + F],
                preferred_element_type=jnp.float32) + vrow(_B1, F)
    f = jnp.maximum(f, 0.0)
    f = jnp.dot(f.astype(jnp.bfloat16), w2_ref[...],
                preferred_element_type=jnp.float32) + vrow(_B2, H)

    # ---- residual + LayerNorm 2 ----
    h2 = h + f
    mu2 = jnp.mean(h2, axis=-1, keepdims=True)
    var2 = jnp.mean((h2 - mu2) ** 2, axis=-1, keepdims=True)
    h2 = (h2 - mu2) * lax.rsqrt(var2 + _LN_EPS) * vrow(_LN2G, H) + vrow(_LN2B, H)

    # ---- mean-pool per sequence (sublane reduction; XLU has slack) ----
    pooled = jnp.mean(h2.reshape(TB, S, H), axis=1)          # (TB, H)

    # ---- fused fc + classifier head: (TB,H)@(H,NCp), lane-dense store ----
    logits = jnp.dot(pooled.astype(jnp.bfloat16), wa_ref[:, o_h:o_h + nc_pad],
                     preferred_element_type=jnp.float32) + vrow(_BHEAD, nc_pad)
    out_ref[...] = logits.reshape(TB, 1, nc_pad)


@functools.partial(jax.jit, static_argnames=("num_classes", "block_batch"))
def single_cell_classifier(packed, token_input, expression_input, *,
                           num_classes, block_batch=1):
    # Glue: embedding lookups + sum (see TODO at top of file).
    x = (packed["token_emb"][token_input]
         + packed["expr_emb"][expression_input]).astype(jnp.float32)   # (B,S,H)
    B, S, H = x.shape
    F = packed["slab_w2"].shape[0]
    nc_pad = _round_up(num_classes, _SEG)
    offs, _ = _segment_offsets(H, F, nc_pad)

    TB = block_batch
    assert B % TB == 0, (B, TB)
    grid = (B // TB,)

    kernel = functools.partial(
        _encoder_classifier_kernel, block_batch=TB, seq=S, hidden=H, ff=F,
        nc_pad=nc_pad, offs=offs)

    # Advisory cost estimate so XLA can overlap the gather with the kernel.
    BS = B * S
    flops = (2 * BS * H * 3 * _SEG          # fused qkv (padded segments)
             + 2 * 2 * B * S * S * H        # scores + p@v
             + 2 * BS * H * H               # output projection
             + 2 * 2 * BS * H * F           # FFN
             + 2 * B * H * nc_pad)          # fused head
    transcendentals = B * S * S + B * S + 2 * BS
    bytes_accessed = int(4 * x.size
                         + 2 * (packed["slab_a"].size + packed["slab_w2"].size)
                         + 4 * packed["slab_vec"].size
                         + 4 * B * nc_pad)
    cost = pl.CostEstimate(flops=int(flops), transcendentals=int(transcendentals),
                           bytes_accessed=bytes_accessed)

    out = pl.pallas_call(
        kernel,
        out_shape=jax.ShapeDtypeStruct((B, 1, nc_pad), jnp.float32),
        grid=grid,
        in_specs=[
            pl.BlockSpec((TB, S, H), lambda b: (b, 0, 0)),
            # Weight slabs: full-array blocks with a constant index_map, so
            # they are DMA'd once and stay resident across all grid steps.
            pl.BlockSpec(packed["slab_a"].shape, lambda b: (0, 0)),
            pl.BlockSpec(packed["slab_w2"].shape, lambda b: (0, 0)),
            pl.BlockSpec(packed["slab_vec"].shape, lambda b: (0, 0)),
        ],
        out_specs=pl.BlockSpec((TB, 1, nc_pad), lambda b: (b, 0, 0)),
        compiler_params=pltpu.CompilerParams(
            dimension_semantics=("parallel",),
            vmem_limit_bytes=32 * 1024 * 1024),
        cost_estimate=cost,
    )(x, packed["slab_a"], packed["slab_w2"], packed["slab_vec"])

    return out[:, 0, :num_classes]                                     # (B, NC)


if __name__ == "__main__":
    # Small shapes consistent with the module's forward.
    token_size = 64
    expression_size = 16
    hidden_size = 32
    num_classes = 19
    batch = 2
    seq = 8

    key = jax.random.PRNGKey(0)
    k_param, k_tok, k_exp = jax.random.split(key, 3)

    params = init_params(k_param, token_size, expression_size, hidden_size,
                         num_classes)
    packed = pack_weights(params)   # hoisted: runs once, not per forward call

    token_input = jax.random.randint(k_tok, (batch, seq), 0, token_size,
                                     dtype=jnp.int32)
    expression_input = jax.random.randint(k_exp, (batch, seq), 0,
                                          expression_size, dtype=jnp.int32)

    logits = single_cell_classifier(packed, token_input, expression_input,
                                    num_classes=num_classes, block_batch=1)
    jax.block_until_ready(logits)
    assert logits.shape == (batch, num_classes), logits.shape
    assert bool(jnp.all(jnp.isfinite(logits))), "non-finite logits"
    print("KERNEL_OK")
</pallas_src>

<mosaic_0001>
module attributes {stable_mosaic.version = 11 : i64} {
  func.func @_encoder_classifier_kernel(%arg0: i32, %arg1: memref<1x8x32xf32, #tpu.memory_space<vmem>>, %arg2: memref<32x768xbf16, #tpu.memory_space<vmem>>, %arg3: memref<128x32xbf16, #tpu.memory_space<vmem>>, %arg4: memref<16x128xf32, #tpu.memory_space<vmem>>, %arg5: memref<1x1x128xf32, #tpu.memory_space<vmem>>) attributes {dimension_semantics = [#tpu.dimension_semantics<parallel>], iteration_bounds = array<i64: 2>, scalar_prefetch = 0 : i64, scratch_operands = 0 : i64, tpu.core_type = #tpu.core_type<tc>, window_params = [{transform_indices = @transform_0, window_bounds = array<i64: 1, 8, 32>}, {pipeline_mode = #tpu.pipeline_mode<synchronous>, transform_indices = @transform_1, window_bounds = array<i64: 32, 768>}, {pipeline_mode = #tpu.pipeline_mode<synchronous>, transform_indices = @transform_2, window_bounds = array<i64: 128, 32>}, {pipeline_mode = #tpu.pipeline_mode<synchronous>, transform_indices = @transform_3, window_bounds = array<i64: 16, 128>}, {transform_indices = @transform_4, window_bounds = array<i64: 1, 1, 128>}]} {
    %c0 = arith.constant 0 : index
    %c0_0 = arith.constant 0 : index
    %c0_1 = arith.constant 0 : index
    %0 = vector.load %arg1[%c0, %c0_0, %c0_1] : memref<1x8x32xf32, #tpu.memory_space<vmem>>, vector<1x8x32xf32>
    %1 = vector.shape_cast %0 : vector<1x8x32xf32> to vector<8x32xf32>
    %2 = arith.truncf %1 : vector<8x32xf32> to vector<8x32xbf16>
    %c0_2 = arith.constant 0 : index
    %c0_3 = arith.constant 0 : index
    %3 = vector.load %arg2[%c0_2, %c0_3] : memref<32x768xbf16, #tpu.memory_space<vmem>>, vector<32x384xbf16>
    %cst = arith.constant dense<0.000000e+00> : vector<8x384xf32>
    %4 = tpu.matmul %2, %3, %cst {dimension_numbers = #tpu.dot_dimension_numbers<[1], [0], [0], [1], [0, 0, 1, 1], [], []>} : vector<8x32xbf16>, vector<32x384xbf16>, vector<8x384xf32> -> vector<8x384xf32>
    %5 = vector.extract_strided_slice %4 {offsets = [0, 0], sizes = [8, 32], strides = [1, 1]} : vector<8x384xf32> to vector<8x32xf32>
    %c0_4 = arith.constant 0 : index
    %c0_5 = arith.constant 0 : index
    %6 = vector.load %arg4[%c0_4, %c0_5] : memref<16x128xf32, #tpu.memory_space<vmem>>, vector<1x32xf32>
    %7 = vector.broadcast %6 : vector<1x32xf32> to vector<8x32xf32>
    %8 = arith.addf %5, %7 : vector<8x32xf32>
    %9 = vector.shape_cast %8 : vector<8x32xf32> to vector<1x8x32xf32>
    %10 = vector.extract_strided_slice %4 {offsets = [0, 128], sizes = [8, 32], strides = [1, 1]} : vector<8x384xf32> to vector<8x32xf32>
    %c1 = arith.constant 1 : index
    %c0_6 = arith.constant 0 : index
    %11 = vector.load %arg4[%c1, %c0_6] : memref<16x128xf32, #tpu.memory_space<vmem>>, vector<1x32xf32>
    %12 = vector.broadcast %11 : vector<1x32xf32> to vector<8x32xf32>
    %13 = arith.addf %10, %12 : vector<8x32xf32>
    %14 = vector.shape_cast %13 : vector<8x32xf32> to vector<1x8x32xf32>
    %15 = vector.extract_strided_slice %4 {offsets = [0, 256], sizes = [8, 32], strides = [1, 1]} : vector<8x384xf32> to vector<8x32xf32>
    %c2 = arith.constant 2 : index
    %c0_7 = arith.constant 0 : index
    %16 = vector.load %arg4[%c2, %c0_7] : memref<16x128xf32, #tpu.memory_space<vmem>>, vector<1x32xf32>
    %17 = vector.broadcast %16 : vector<1x32xf32> to vector<8x32xf32>
    %18 = arith.addf %15, %17 : vector<8x32xf32>
    %19 = vector.shape_cast %18 : vector<8x32xf32> to vector<1x8x32xf32>
    %20 = arith.truncf %9 : vector<1x8x32xf32> to vector<1x8x32xbf16>
    %21 = arith.truncf %14 : vector<1x8x32xf32> to vector<1x8x32xbf16>
    "tpu.trace_start"() <{level = 10 : i32, message = "bqh,bkh->bqk"}> : () -> ()
    %cst_8 = arith.constant dense<0.000000e+00> : vector<1x8x8xf32>
    %22 = tpu.matmul %20, %21, %cst_8 {dimension_numbers = #tpu.dot_dimension_numbers<[2], [2], [1], [1], [0, 0, 0, 1, 1, 1], [0], [0]>} : vector<1x8x32xbf16>, vector<1x8x32xbf16>, vector<1x8x8xf32> -> vector<1x8x8xf32>
    "tpu.trace_stop"() : () -> ()
    %cst_9 = arith.constant 0.176776692 : f32
    %23 = vector.broadcast %cst_9 : f32 to vector<1x8x8xf32>
    %24 = arith.mulf %22, %23 : vector<1x8x8xf32>
    %cst_10 = arith.constant dense<0xFF800000> : vector<1x8xf32>
    %25 = vector.multi_reduction <maximumf>, %24, %cst_10 [2] : vector<1x8x8xf32> to vector<1x8xf32>
    %26 = vector.shape_cast %25 : vector<1x8xf32> to vector<1x8x1xf32>
    %27 = vector.broadcast %26 : vector<1x8x1xf32> to vector<1x8x8xf32>
    %28 = arith.subf %24, %27 : vector<1x8x8xf32>
    %29 = math.exp %28 : vector<1x8x8xf32>
    %cst_11 = arith.constant dense<0.000000e+00> : vector<1x8xf32>
    %30 = vector.multi_reduction <add>, %29, %cst_11 [2] : vector<1x8x8xf32> to vector<1x8xf32>
    %31 = vector.shape_cast %30 : vector<1x8xf32> to vector<1x8x1xf32>
    %32 = tpu.reciprocal %31 {approx = true} : vector<1x8x1xf32> -> vector<1x8x1xf32>
    %33 = vector.broadcast %32 : vector<1x8x1xf32> to vector<1x8x8xf32>
    %34 = arith.mulf %29, %33 : vector<1x8x8xf32>
    %35 = arith.truncf %34 : vector<1x8x8xf32> to vector<1x8x8xbf16>
    %36 = arith.truncf %19 : vector<1x8x32xf32> to vector<1x8x32xbf16>
    "tpu.trace_start"() <{level = 10 : i32, message = "bqk,bkh->bqh"}> : () -> ()
    %cst_12 = arith.constant dense<0.000000e+00> : vector<1x8x32xf32>
    %37 = tpu.matmul %35, %36, %cst_12 {dimension_numbers = #tpu.dot_dimension_numbers<[2], [1], [1], [2], [0, 0, 0, 1, 1, 2], [0], [0]>} : vector<1x8x8xbf16>, vector<1x8x32xbf16>, vector<1x8x32xf32> -> vector<1x8x32xf32>
    "tpu.trace_stop"() : () -> ()
    %38 = vector.shape_cast %37 : vector<1x8x32xf32> to vector<8x32xf32>
    %39 = arith.truncf %38 : vector<8x32xf32> to vector<8x32xbf16>
    %c0_13 = arith.constant 0 : index
    %c384 = arith.constant 384 : index
    %40 = vector.load %arg2[%c0_13, %c384] : memref<32x768xbf16, #tpu.memory_space<vmem>>, vector<32x32xbf16>
    %cst_14 = arith.constant dense<0.000000e+00> : vector<8x32xf32>
    %41 = tpu.matmul %39, %40, %cst_14 {dimension_numbers = #tpu.dot_dimension_numbers<[1], [0], [0], [1], [0, 0, 1, 1], [], []>} : vector<8x32xbf16>, vector<32x32xbf16>, vector<8x32xf32> -> vector<8x32xf32>
    %c3 = arith.constant 3 : index
    %c0_15 = arith.constant 0 : index
    %42 = vector.load %arg4[%c3, %c0_15] : memref<16x128xf32, #tpu.memory_space<vmem>>, vector<1x32xf32>
    %43 = vector.broadcast %42 : vector<1x32xf32> to vector<8x32xf32>
    %44 = arith.addf %41, %43 : vector<8x32xf32>
    %45 = arith.addf %1, %44 : vector<8x32xf32>
    %cst_16 = arith.constant dense<0.000000e+00> : vector<8xf32>
    %46 = vector.multi_reduction <add>, %45, %cst_16 [1] : vector<8x32xf32> to vector<8xf32>
    %47 = vector.shape_cast %46 : vector<8xf32> to vector<8x1xf32>
    %cst_17 = arith.constant 3.200000e+01 : f32
    %48 = vector.broadcast %cst_17 : f32 to vector<8x1xf32>
    %49 = arith.divf %47, %48 : vector<8x1xf32>
    %50 = vector.broadcast %49 : vector<8x1xf32> to vector<8x32xf32>
    %51 = arith.subf %45, %50 : vector<8x32xf32>
    %52 = arith.mulf %51, %51 : vector<8x32xf32>
    %cst_18 = arith.constant dense<0.000000e+00> : vector<8xf32>
    %53 = vector.multi_reduction <add>, %52, %cst_18 [1] : vector<8x32xf32> to vector<8xf32>
    %54 = vector.shape_cast %53 : vector<8xf32> to vector<8x1xf32>
    %cst_19 = arith.constant 3.200000e+01 : f32
    %55 = vector.broadcast %cst_19 : f32 to vector<8x1xf32>
    %56 = arith.divf %54, %55 : vector<8x1xf32>
    %57 = vector.broadcast %49 : vector<8x1xf32> to vector<8x32xf32>
    %58 = arith.subf %45, %57 : vector<8x32xf32>
    %cst_20 = arith.constant 9.99999974E-6 : f32
    %59 = vector.broadcast %cst_20 : f32 to vector<8x1xf32>
    %60 = arith.addf %56, %59 : vector<8x1xf32>
    %61 = math.rsqrt %60 : vector<8x1xf32>
    %62 = vector.broadcast %61 : vector<8x1xf32> to vector<8x32xf32>
    %63 = arith.mulf %58, %62 : vector<8x32xf32>
    %c4 = arith.constant 4 : index
    %c0_21 = arith.constant 0 : index
    %64 = vector.load %arg4[%c4, %c0_21] : memref<16x128xf32, #tpu.memory_space<vmem>>, vector<1x32xf32>
    %65 = vector.broadcast %64 : vector<1x32xf32> to vector<8x32xf32>
    %66 = arith.mulf %63, %65 : vector<8x32xf32>
    %c5 = arith.constant 5 : index
    %c0_22 = arith.constant 0 : index
    %67 = vector.load %arg4[%c5, %c0_22] : memref<16x128xf32, #tpu.memory_space<vmem>>, vector<1x32xf32>
    %68 = vector.broadcast %67 : vector<1x32xf32> to vector<8x32xf32>
    %69 = arith.addf %66, %68 : vector<8x32xf32>
    %70 = arith.truncf %69 : vector<8x32xf32> to vector<8x32xbf16>
    %c0_23 = arith.constant 0 : index
    %c512 = arith.constant 512 : index
    %71 = vector.load %arg2[%c0_23, %c512] : memref<32x768xbf16, #tpu.memory_space<vmem>>, vector<32x128xbf16>
    %cst_24 = arith.constant dense<0.000000e+00> : vector<8x128xf32>
    %72 = tpu.matmul %70, %71, %cst_24 {dimension_numbers = #tpu.dot_dimension_numbers<[1], [0], [0], [1], [0, 0, 1, 1], [], []>} : vector<8x32xbf16>, vector<32x128xbf16>, vector<8x128xf32> -> vector<8x128xf32>
    %c6 = arith.constant 6 : index
    %c0_25 = arith.constant 0 : index
    %73 = vector.load %arg4[%c6, %c0_25] : memref<16x128xf32, #tpu.memory_space<vmem>>, vector<1x128xf32>
    %74 = vector.broadcast %73 : vector<1x128xf32> to vector<8x128xf32>
    %75 = arith.addf %72, %74 : vector<8x128xf32>
    %cst_26 = arith.constant 0.000000e+00 : f32
    %76 = vector.broadcast %cst_26 : f32 to vector<8x128xf32>
    %77 = arith.maximumf %75, %76 : vector<8x128xf32>
    %78 = arith.truncf %77 : vector<8x128xf32> to vector<8x128xbf16>
    %c0_27 = arith.constant 0 : index
    %c0_28 = arith.constant 0 : index
    %79 = vector.load %arg3[%c0_27, %c0_28] : memref<128x32xbf16, #tpu.memory_space<vmem>>, vector<128x32xbf16>
    %cst_29 = arith.constant dense<0.000000e+00> : vector<8x32xf32>
    %80 = tpu.matmul %78, %79, %cst_29 {dimension_numbers = #tpu.dot_dimension_numbers<[1], [0], [0], [1], [0, 0, 1, 1], [], []>} : vector<8x128xbf16>, vector<128x32xbf16>, vector<8x32xf32> -> vector<8x32xf32>
    %c7 = arith.constant 7 : index
    %c0_30 = arith.constant 0 : index
    %81 = vector.load %arg4[%c7, %c0_30] : memref<16x128xf32, #tpu.memory_space<vmem>>, vector<1x32xf32>
    %82 = vector.broadcast %81 : vector<1x32xf32> to vector<8x32xf32>
    %83 = arith.addf %80, %82 : vector<8x32xf32>
    %84 = arith.addf %69, %83 : vector<8x32xf32>
    %cst_31 = arith.constant dense<0.000000e+00> : vector<8xf32>
    %85 = vector.multi_reduction <add>, %84, %cst_31 [1] : vector<8x32xf32> to vector<8xf32>
    %86 = vector.shape_cast %85 : vector<8xf32> to vector<8x1xf32>
    %cst_32 = arith.constant 3.200000e+01 : f32
    %87 = vector.broadcast %cst_32 : f32 to vector<8x1xf32>
    %88 = arith.divf %86, %87 : vector<8x1xf32>
    %89 = vector.broadcast %88 : vector<8x1xf32> to vector<8x32xf32>
    %90 = arith.subf %84, %89 : vector<8x32xf32>
    %91 = arith.mulf %90, %90 : vector<8x32xf32>
    %cst_33 = arith.constant dense<0.000000e+00> : vector<8xf32>
    %92 = vector.multi_reduction <add>, %91, %cst_33 [1] : vector<8x32xf32> to vector<8xf32>
    %93 = vector.shape_cast %92 : vector<8xf32> to vector<8x1xf32>
    %cst_34 = arith.constant 3.200000e+01 : f32
    %94 = vector.broadcast %cst_34 : f32 to vector<8x1xf32>
    %95 = arith.divf %93, %94 : vector<8x1xf32>
    %96 = vector.broadcast %88 : vector<8x1xf32> to vector<8x32xf32>
    %97 = arith.subf %84, %96 : vector<8x32xf32>
    %cst_35 = arith.constant 9.99999974E-6 : f32
    %98 = vector.broadcast %cst_35 : f32 to vector<8x1xf32>
    %99 = arith.addf %95, %98 : vector<8x1xf32>
    %100 = math.rsqrt %99 : vector<8x1xf32>
    %101 = vector.broadcast %100 : vector<8x1xf32> to vector<8x32xf32>
    %102 = arith.mulf %97, %101 : vector<8x32xf32>
    %c8 = arith.constant 8 : index
    %c0_36 = arith.constant 0 : index
    %103 = vector.load %arg4[%c8, %c0_36] : memref<16x128xf32, #tpu.memory_space<vmem>>, vector<1x32xf32>
    %104 = vector.broadcast %103 : vector<1x32xf32> to vector<8x32xf32>
    %105 = arith.mulf %102, %104 : vector<8x32xf32>
    %c9 = arith.constant 9 : index
    %c0_37 = arith.constant 0 : index
    %106 = vector.load %arg4[%c9, %c0_37] : memref<16x128xf32, #tpu.memory_space<vmem>>, vector<1x32xf32>
    %107 = vector.broadcast %106 : vector<1x32xf32> to vector<8x32xf32>
    %108 = arith.addf %105, %107 : vector<8x32xf32>
    %109 = vector.shape_cast %108 : vector<8x32xf32> to vector<1x8x32xf32>
    %cst_38 = arith.constant dense<0.000000e+00> : vector<1x32xf32>
    %110 = vector.multi_reduction <add>, %109, %cst_38 [1] : vector<1x8x32xf32> to vector<1x32xf32>
    %cst_39 = arith.constant 8.000000e+00 : f32
    %111 = vector.broadcast %cst_39 : f32 to vector<1x32xf32>
    %112 = arith.divf %110, %111 : vector<1x32xf32>
    %113 = arith.truncf %112 : vector<1x32xf32> to vector<1x32xbf16>
    %c0_40 = arith.constant 0 : index
    %c640 = arith.constant 640 : index
    %114 = vector.load %arg2[%c0_40, %c640] : memref<32x768xbf16, #tpu.memory_space<vmem>>, vector<32x128xbf16>
    %cst_41 = arith.constant dense<0.000000e+00> : vector<1x128xf32>
    %115 = tpu.matmul %113, %114, %cst_41 {dimension_numbers = #tpu.dot_dimension_numbers<[1], [0], [0], [1], [0, 0, 1, 1], [], []>} : vector<1x32xbf16>, vector<32x128xbf16>, vector<1x128xf32> -> vector<1x128xf32>
    %c10 = arith.constant 10 : index
    %c0_42 = arith.constant 0 : index
    %116 = vector.load %arg4[%c10, %c0_42] : memref<16x128xf32, #tpu.memory_space<vmem>>, vector<1x128xf32>
    %117 = arith.addf %115, %116 : vector<1x128xf32>
    %118 = vector.shape_cast %117 : vector<1x128xf32> to vector<1x1x128xf32>
    %c0_43 = arith.constant 0 : index
    %c0_44 = arith.constant 0 : index
    %c0_45 = arith.constant 0 : index
    %119 = vector.load %arg5[%c0_43, %c0_44, %c0_45] : memref<1x1x128xf32, #tpu.memory_space<vmem>>, vector<1x1x128xf32>
    tpu.vector_store %arg5[%c0_43, %c0_44, %c0_45], %118 {strides = array<i32>} : memref<1x1x128xf32, #tpu.memory_space<vmem>>, vector<1x1x128xf32>,
    return
  }
  func.func @transform_0(%arg0: i32) -> (i32, i32, i32) {
    %c0_i32 = arith.constant 0 : i32
    %c0_i32_0 = arith.constant 0 : i32
    %c0_i32_1 = arith.constant 0 : i32
    return %arg0, %c0_i32, %c0_i32_0 : i32, i32, i32
  }
  func.func @transform_1(%arg0: i32) -> (i32, i32) {
    %c0_i32 = arith.constant 0 : i32
    %c0_i32_0 = arith.constant 0 : i32
    %c0_i32_1 = arith.constant 0 : i32
    return %c0_i32, %c0_i32_0 : i32, i32
  }
  func.func @transform_2(%arg0: i32) -> (i32, i32) {
    %c0_i32 = arith.constant 0 : i32
    %c0_i32_0 = arith.constant 0 : i32
    %c0_i32_1 = arith.constant 0 : i32
    return %c0_i32, %c0_i32_0 : i32, i32
  }
  func.func @transform_3(%arg0: i32) -> (i32, i32) {
    %c0_i32 = arith.constant 0 : i32
    %c0_i32_0 = arith.constant 0 : i32
    %c0_i32_1 = arith.constant 0 : i32
    return %c0_i32, %c0_i32_0 : i32, i32
  }
  func.func @transform_4(%arg0: i32) -> (i32, i32, i32) {
    %c0_i32 = arith.constant 0 : i32
    %c0_i32_0 = arith.constant 0 : i32
    %c0_i32_1 = arith.constant 0 : i32
    return %arg0, %c0_i32, %c0_i32_0 : i32, i32, i32
  }
}

</mosaic_0001>

<llo_original>
// kernel: single_cell_classifier.1
$region0: #{single_cell_classifier.1}
  #allocation0 [shape = 'u32[]', space=smem, size = 0x4, offset = 0x4, fixed_abs, tag = 'smem constant byte address 0x4 - core index']
  #allocation1 [shape = 'u32[144,128]{1,0:T(1,128)}', space=vmem, size = 0x12000, scoped, tag = 'internal scratch']
  %s0 = inlined_call_operand.vmem [shape: f32[2,8,32], index: 0, kind: input, shape index: {}]
  %s1 = inlined_call_operand.vmem [shape: bf16[32,768], index: 1, kind: input, shape index: {}]
  %s2 = inlined_call_operand.vmem [shape: bf16[128,32], index: 2, kind: input, shape index: {}]
  %s3 = inlined_call_operand.vmem [shape: f32[16,128], index: 3, kind: input, shape index: {}]
  %s4 = inlined_call_operand.hbm [shape: f32[2,1,128], index: 4, kind: output, shape index: {}]
  %s5 = sld [smem:[#allocation0]]
  $region49: #{single_cell_classifier.1} parent=0
    _
  %s7 = ssub.s32 1, %s5
  %s8 = scalar_select 0, %s7, %s5
  $region1: #{single_cell_classifier.1} parent=0
    #allocation2 [shape = 'u8[1024]{0}', space=vmem, size = 0x400, scoped, tag = 'output window, operand 0']
    #allocation3 [shape = 's32[2]{0}', space=sflag, size = 0x8, scoped, tag = 'scoped memory for single_cell_classifier.1']
    %9 = vsyncpa [#allocation3], 0
    %s10 = scalar_lea.sflag [#allocation3], 1
    %11 = vsyncpa %s10, 0
    loop: start=0, step=1, limit=4
    $region2: #{single_cell_classifier.1} parent=1 // loop_pre_header
      _
    $region3: #{single_cell_classifier.1} parent=1 // loop_header
      %s13 = sphi 0, %s17
      %p14 = scmp.ge.s32.totalorder %s13, 4
      %s23 = sphi 0, %s25
      %s26 = sphi 0, %s23
      %s27 = sphi 0, %s26
      %s43 = sphi 0, %s27
      %s47 = sphi 0, %s47
      %s49 = sphi 0, %s47
      %s50 = sphi 0, %s49
      %s64 = sphi 0, %s50
      %s68 = sphi 0, %s68
      %s70 = sphi 0, %s68
      %s71 = sphi 0, %s70
      %s85 = sphi 0, %s71
      %s89 = sphi 0, %s89
      %s91 = sphi 0, %s89
      %s92 = sphi 0, %s91
      %s106 = sphi 0, %s92
      %s112 = sphi 0, %s114
      %s115 = sphi 0, %s112
      %s116 = sphi 0, %s115
      %s132 = sphi 0, %s116
    $region4: #{single_cell_classifier.1} parent=1 // loop_header_branch
      %16 = sbr.rel (%p14) target = $region8
    $region5: #{single_cell_classifier.1} parent=1 // loop_body
      %s18 = ssub.s32 %s13, 1
      %s19 = ssub.s32 %s13, 2
      %s20 = sadd.s32 %s13, 1
      %s21 = ssub.s32 %s13, %s20
      %p22 = scmp.eq.s32.totalorder %s21, 0
      %s24 = sadd.s32 %s23, 1
      %s25 = scalar_select %p22, %s23, %s24
      %p28 = pneg %p22
      %p29 = scmp.eq.s32.totalorder %s13, 1
      %p30 = por %p28, %p29
      %p31 = scmp.ne.s32.totalorder %s23, %s26
      %p32 = scmp.eq.s32.totalorder %s13, 0
      %p33 = por %p31, %p32
      %p34 = scmp.ne.s32.totalorder %s23, %s26
      %p35 = scmp.eq.s32.totalorder %s18, 1
      %p36 = por %p34, %p35
      %p37 = scmp.ne.s32.totalorder %s26, %s27
      %p38 = scmp.eq.s32.totalorder %s18, 0
      %p39 = por %p37, %p38
      %p40 = scmp.ne.s32.totalorder %s26, %s27
      %p41 = scmp.eq.s32.totalorder %s19, 1
      %p42 = por %p40, %p41
      %p44 = scmp.ne.s32.totalorder %s27, %s43
      %p45 = scmp.eq.s32.totalorder %s19, 0
      %p46 = por %p44, %p45
      %s48 = sadd.s32 %s47, 1
      %p51 = scmp.eq.s32.totalorder %s13, 1
      %p52 = scmp.ne.s32.totalorder %s47, %s49
      %p53 = scmp.eq.s32.totalorder %s13, 0
      %p54 = por %p52, %p53
      %p55 = scmp.ne.s32.totalorder %s47, %s49
      %p56 = scmp.eq.s32.totalorder %s18, 1
      %p57 = por %p55, %p56
      %p58 = scmp.ne.s32.totalorder %s49, %s50
      %p59 = scmp.eq.s32.totalorder %s18, 0
      %p60 = por %p58, %p59
      %p61 = scmp.ne.s32.totalorder %s49, %s50
      %p62 = scmp.eq.s32.totalorder %s19, 1
      %p63 = por %p61, %p62
      %p65 = scmp.ne.s32.totalorder %s50, %s64
      %p66 = scmp.eq.s32.totalorder %s19, 0
      %p67 = por %p65, %p66
      %s69 = sadd.s32 %s68, 1
      %p72 = scmp.eq.s32.totalorder %s13, 1
      %p73 = scmp.ne.s32.totalorder %s68, %s70
      %p74 = scmp.eq.s32.totalorder %s13, 0
      %p75 = por %p73, %p74
      %p76 = scmp.ne.s32.totalorder %s68, %s70
      %p77 = scmp.eq.s32.totalorder %s18, 1
      %p78 = por %p76, %p77
      %p79 = scmp.ne.s32.totalorder %s70, %s71
      %p80 = scmp.eq.s32.totalorder %s18, 0
      %p81 = por %p79, %p80
      %p82 = scmp.ne.s32.totalorder %s70, %s71
      %p83 = scmp.eq.s32.totalorder %s19, 1
      %p84 = por %p82, %p83
      %p86 = scmp.ne.s32.totalorder %s71, %s85
      %p87 = scmp.eq.s32.totalorder %s19, 0
      %p88 = por %p86, %p87
      %s90 = sadd.s32 %s89, 1
      %p93 = scmp.eq.s32.totalorder %s13, 1
      %p94 = scmp.ne.s32.totalorder %s89, %s91
      %p95 = scmp.eq.s32.totalorder %s13, 0
      %p96 = por %p94, %p95
      %p97 = scmp.ne.s32.totalorder %s89, %s91
      %p98 = scmp.eq.s32.totalorder %s18, 1
      %p99 = por %p97, %p98
      %p100 = scmp.ne.s32.totalorder %s91, %s92
      %p101 = scmp.eq.s32.totalorder %s18, 0
      %p102 = por %p100, %p101
      %p103 = scmp.ne.s32.totalorder %s91, %s92
      %p104 = scmp.eq.s32.totalorder %s19, 1
      %p105 = por %p103, %p104
      %p107 = scmp.ne.s32.totalorder %s92, %s106
      %p108 = scmp.eq.s32.totalorder %s19, 0
      %p109 = por %p107, %p108
      %s110 = ssub.s32 %s13, %s20
      %p111 = scmp.eq.s32.totalorder %s110, 0
      %s113 = sadd.s32 %s112, 1
      %s114 = scalar_select %p111, %s112, %s113
      %p117 = pneg %p111
      %p118 = scmp.eq.s32.totalorder %s13, 1
      %p119 = por %p117, %p118
      %p120 = scmp.ne.s32.totalorder %s112, %s115
      %p121 = scmp.eq.s32.totalorder %s13, 0
      %p122 = por %p120, %p121
      %p123 = scmp.ne.s32.totalorder %s112, %s115
      %p124 = scmp.eq.s32.totalorder %s18, 1
      %p125 = por %p123, %p124
      %p126 = scmp.ne.s32.totalorder %s115, %s116
      %p127 = scmp.eq.s32.totalorder %s18, 0
      %p128 = por %p126, %p127
      %p129 = scmp.ne.s32.totalorder %s115, %s116
      %p130 = scmp.eq.s32.totalorder %s19, 1
      %p131 = por %p129, %p130
      %p133 = scmp.ne.s32.totalorder %s116, %s132
      %p134 = scmp.eq.s32.totalorder %s19, 0
      %p135 = por %p133, %p134
      %p136 = scmp.le.s32.totalorder 1, %s13
      %p137 = scmp.lt.s32.totalorder %s13, 3
      %p138 = pnand %p136, %p137
      %p139 = pneg %p138
      // Predicated region
      $region9: #{single_cell_classifier.1} parent=5 // pred_check
        _
      $region10: #{single_cell_classifier.1} parent=5 // pred_check_branch
        %141 = sbr.rel (%p138) target = $region12
      $region11: #{single_cell_classifier.1} parent=5 // pred_region
        %s142 = ssub.s32 %s13, 1
        // Predicated region
        $region13: #{single_cell_classifier.1} parent=11 // pred_check
          %p143 = pneg %p60
        $region14: #{single_cell_classifier.1} parent=11 // pred_check_branch
          %145 = sbr.rel (%p143) target = $region16
        $region15: #{single_cell_classifier.1} parent=11 // pred_region
          _
        $region16: #{single_cell_classifier.1} parent=11 // pred_fallthru
          _
        // Predicated region
        $region17: #{single_cell_classifier.1} parent=11 // pred_check
          %p146 = pneg %p81
        $region18: #{single_cell_classifier.1} parent=11 // pred_check_branch
          %148 = sbr.rel (%p146) target = $region20
        $region19: #{single_cell_classifier.1} parent=11 // pred_region
          _
        $region20: #{single_cell_classifier.1} parent=11 // pred_fallthru
          _
        // Predicated region
        $region21: #{single_cell_classifier.1} parent=11 // pred_check
          %p149 = pneg %p102
        $region22: #{single_cell_classifier.1} parent=11 // pred_check_branch
          %151 = sbr.rel (%p149) target = $region24
        $region23: #{single_cell_classifier.1} parent=11 // pred_region
          _
        $region24: #{single_cell_classifier.1} parent=11 // pred_fallthru
          _
      $region12: #{single_cell_classifier.1} parent=5 // pred_fallthru
        _
      %p152 = scmp.lt.s32.totalorder %s13, 2
      // Predicated region
      $region25: #{single_cell_classifier.1} parent=5 // pred_check
        %p153 = pneg %p152
      $region26: #{single_cell_classifier.1} parent=5 // pred_check_branch
        %155 = sbr.rel (%p153) target = $region28
      $region27: #{single_cell_classifier.1} parent=5 // pred_region
        // Predicated region
        $region29: #{single_cell_classifier.1} parent=27 // pred_check
          %p156 = pneg %p33
        $region30: #{single_cell_classifier.1} parent=27 // pred_check_branch
          %158 = sbr.rel (%p156) target = $region32
        $region31: #{single_cell_classifier.1} parent=27 // pred_region
          %p159 = scmp.lt.s32.totalorder %s13, 1
          %s160 = scalar_select %p159, %s13, 1
          %s161 = smul.addr %s160, 8
          %s162 = scalar_lea.vmem %s0, %s161
        $region32: #{single_cell_classifier.1} parent=27 // pred_fallthru
          _
      $region28: #{single_cell_classifier.1} parent=5 // pred_fallthru
        _
      %p163 = scmp.le.s32.totalorder 1, %s13
      %p164 = scmp.lt.s32.totalorder %s13, 3
      %p165 = pnand %p163, %p164
      %p166 = pneg %p165
      // Predicated region
      $region33: #{single_cell_classifier.1} parent=5 // pred_check
        _
      $region34: #{single_cell_classifier.1} parent=5 // pred_check_branch
        %168 = sbr.rel (%p165) target = $region36
      $region35: #{single_cell_classifier.1} parent=5 // pred_region
        %s169 = ssub.s32 %s13, 1
        %p170 = scmp.lt.s32.totalorder %s18, 1
        %s171 = scalar_select %p170, %s18, 1
        %s172 = smul.addr %s171, 8
        %s173 = scalar_lea.vmem %s0, %s172
        %p174 = pneg %p39
        %p175 = pneg %p36
        %p176 = pneg %p60
        %p177 = pneg %p57
        %p178 = pneg %p81
        %p179 = pneg %p78
        %p180 = pneg %p102
        %p181 = pneg %p99
        %p182 = pneg %p128
        %p183 = pneg %p125
        %s184 = sand.u32 %s115, 1
        %s185 = scalar_lea.sflag [#allocation3], %s184
        %s186 = sand.u32 %s115, 1
        %s187 = scalar_lea.vmem [#allocation2], %s186
        %p188 = scmp.lt.s32.totalorder %s18, 1
        %s189 = scalar_select %p188, %s18, 1
        %s190 = smul.addr %s189, 8
        %s191 = scalar_lea.vmem %s0, %s190
        %v193 = vld [vmem:[%s191] sm:$0xff]
        %v194 = vpack.c.bf16 %v193, %v193
        %v195 = vld [vmem:[%s1] sm:$0xff]
        %v196 = vld [vmem:[%s1 + $0x8] sm:$0xf]
        %v197 = vld [vmem:[%s1 + $0x18] sm:$0xff]
        %v198 = vld [vmem:[%s1 + $0x20] sm:$0xf]
        %v199 = vld [vmem:[%s1 + $0x30] sm:$0xff]
        %v200 = vld [vmem:[%s1 + $0x38] sm:$0xf]
        %v201 = vld [vmem:[%s1 + $0x48] sm:$0xff]
        %v202 = vld [vmem:[%s1 + $0x50] sm:$0xf]
        %v211 = vunpack.c.l.b16 %v195
        %v212 = vunpack.c.h.b16 %v195
        %v213 = vunpack.c.l.b16 %v196
        %v214 = vunpack.c.l.b16 %v197
        %v215 = vunpack.c.h.b16 %v197
        %v216 = vunpack.c.l.b16 %v198
        %v217 = vunpack.c.l.b16 %v199
        %v218 = vunpack.c.h.b16 %v199
        %v219 = vunpack.c.l.b16 %v200
        %v220 = vunpack.c.l.b16 %v201
        %v221 = vunpack.c.h.b16 %v201
        %v222 = vunpack.c.l.b16 %v202
        %v223 = vpack.c.b16 %v214, %v211
        %v224 = vpack.c.b16 %v215, %v212
        %v225 = vpack.c.b16 %v216, %v213
        %v226 = vpack.c.b16 %v220, %v217
        %v227 = vpack.c.b16 %v221, %v218
        %v228 = vpack.c.b16 %v222, %v219
        %vm235 = vcmask 261120
        %v237 = vsel %vm235, %v194, 0
        %239 = vmatprep.subr.bf16.mxu0 0
        %240 = vmatpush1.bf16.msra.mxu0 0
        %241 = vmatprep.subr.bf16.mxu0 0
        %242 = vmatpush1.bf16.msra.mxu0 0
        %243 = vmatprep.subr.bf16.mxu0 0
        %244 = vmatpush1.bf16.msra.mxu0 0
        %245 = vmatprep.subr.bf16.mxu0 0
        %246 = vmatpush1.bf16.msra.mxu0 0
        %247 = vmatprep.subr.bf16.mxu0 0
        %248 = vmatpush1.bf16.msra.mxu0 0
        %249 = vmatprep.subr.bf16.mxu0 0
        %250 = vmatpush1.bf16.msra.mxu0 0
        %251 = vmatprep.subr.bf16.mxu0 %v227
        %252 = vmatpush1.bf16.msra.mxu0 %v226
        %253 = vmatprep.subr.bf16.mxu0 %v224
        %254 = vmatpush1.bf16.msra.mxu0 %v223
        %255 = vmatprep.subr.bf16.mxu0 0
        %256 = vmatpush2.bf16.msra.mxu0 0
        %257 = vmatprep.subr.bf16.mxu0 0
        %258 = vmatpush2.bf16.msra.mxu0 0
        %259 = vmatprep.subr.bf16.mxu0 0
        %260 = vmatpush2.bf16.msra.mxu0 0
        %261 = vmatprep.subr.bf16.mxu0 0
        %262 = vmatpush2.bf16.msra.mxu0 0
        %263 = vmatprep.subr.bf16.mxu0 0
        %264 = vmatpush2.bf16.msra.mxu0 0
        %265 = vmatprep.subr.bf16.mxu0 0
        %266 = vmatpush2.bf16.msra.mxu0 0
        %267 = vmatprep.subr.bf16.mxu0 0
        %268 = vmatpush2.bf16.msra.mxu0 0
        %269 = vmatprep.subr.bf16.mxu0 0
        %270 = vmatpush2.bf16.msra.mxu0 0
        %271 = vmatprep.mubr.bf16.mxu0 0
        %272 = vmatmul.mubr.bf16.gmra.mxu0 %v237
        %v273 = vpop.f32.mrf.mxu0
        %v274 = vadd.f32 0.0, %v273
        %v275 = vpop.f32.mrf.mxu0
        %v276 = vadd.f32 0.0, %v275
        %v277 = vpop.f32.mrf.mxu0
        %v278 = vpop.f32.mrf.mxu0
        %279 = vdwg.mxu0
        %280 = vmatprep.subr.bf16.mxu0 0
        %281 = vmatpush1.bf16.msra.mxu0 0
        %282 = vmatprep.subr.bf16.mxu0 0
        %283 = vmatpush1.bf16.msra.mxu0 0
        %284 = vmatprep.subr.bf16.mxu0 0
        %285 = vmatpush1.bf16.msra.mxu0 0
        %286 = vmatprep.subr.bf16.mxu0 0
        %287 = vmatpush1.bf16.msra.mxu0 0
        %288 = vmatprep.subr.bf16.mxu0 0
        %289 = vmatpush1.bf16.msra.mxu0 0
        %290 = vmatprep.subr.bf16.mxu0 0
        %291 = vmatpush1.bf16.msra.mxu0 0
        %292 = vmatprep.subr.bf16.mxu0 0
        %293 = vmatpush1.bf16.msra.mxu0 %v228
        %294 = vmatprep.subr.bf16.mxu0 0
        %295 = vmatpush1.bf16.msra.mxu0 %v225
        %296 = vmatprep.subr.bf16.mxu0 0
        %297 = vmatpush2.bf16.msra.mxu0 0
        %298 = vmatprep.subr.bf16.mxu0 0
        %299 = vmatpush2.bf16.msra.mxu0 0
        %300 = vmatprep.subr.bf16.mxu0 0
        %301 = vmatpush2.bf16.msra.mxu0 0
        %302 = vmatprep.subr.bf16.mxu0 0
        %303 = vmatpush2.bf16.msra.mxu0 0
        %304 = vmatprep.subr.bf16.mxu0 0
        %305 = vmatpush2.bf16.msra.mxu0 0
        %306 = vmatprep.subr.bf16.mxu0 0
        %307 = vmatpush2.bf16.msra.mxu0 0
        %308 = vmatprep.subr.bf16.mxu0 0
        %309 = vmatpush2.bf16.msra.mxu0 0
        %310 = vmatprep.subr.bf16.mxu0 0
        %311 = vmatpush2.bf16.msra.mxu0 0
        %312 = vmatprep.mubr.bf16.mxu0 0
        %313 = vmatmul.mubr.bf16.gmra.mxu0 %v237
        %v314 = vpop.f32.mrf.mxu0
        %v315 = vadd.f32 0.0, %v314
        %v316 = vpop.f32.mrf.mxu0
        %v317 = vpop.f32.mrf.mxu0
        %v318 = vpop.f32.mrf.mxu0
        %319 = vdwg.mxu0
        %v320 = vld [vmem:[%s3] sm:$0x1]
        %v321 = vlaneseq
        %v322 = vshrl.u32 %v321, 7
        %v323 = vsub.s32 0, %v322
        %v324 = vrot.slane %v320, %v323
        %v325 = vadd.f32 %v274, %v324
        %v326 = vld [vmem:[%s3 + $0x1] sm:$0x1]
        %v327 = vlaneseq
        %v328 = vshrl.u32 %v327, 7
        %v329 = vsub.s32 0, %v328
        %v330 = vrot.slane %v326, %v329
        %v331 = vadd.f32 %v276, %v330
        %v332 = vld [vmem:[%s3 + $0x2] sm:$0x1]
        %v333 = vlaneseq
        %v334 = vshrl.u32 %v333, 7
        %v335 = vsub.s32 0, %v334
        %v336 = vrot.slane %v332, %v335
        %v337 = vadd.f32 %v315, %v336
        %v338 = vpack.c.bf16 %v325, %v325
        %v339 = vpack.c.bf16 %v331, %v331
        %v341 = vsel %vm235, %v338, 0
        %v344 = vsel %vm235, %v339, 0
        %346 = vmatprep.subr.bf16.mxu0 0
        %347 = vmatpush1.bf16.xpose.msra.mxu0 0
        %348 = vmatprep.subr.bf16.mxu0 0
        %349 = vmatpush1.bf16.xpose.msra.mxu0 0
        %350 = vmatprep.subr.bf16.mxu0 0
        %351 = vmatpush1.bf16.xpose.msra.mxu0 0
        %352 = vmatprep.subr.bf16.mxu0 0
        %353 = vmatpush1.bf16.xpose.msra.mxu0 0
        %354 = vmatprep.subr.bf16.mxu0 0
        %355 = vmatpush1.bf16.xpose.msra.mxu0 0
        %356 = vmatprep.subr.bf16.mxu0 0
        %357 = vmatpush1.bf16.xpose.msra.mxu0 0
        %358 = vmatprep.subr.bf16.mxu0 0
        %359 = vmatpush1.bf16.xpose.msra.mxu0 0
        %360 = vmatprep.subr.bf16.mxu0 0
        %361 = vmatpush1.bf16.xpose.msra.mxu0 %v344
        %362 = vmatprep.subr.bf16.mxu0 0
        %363 = vmatpush2.bf16.xpose.msra.mxu0 0
        %364 = vmatprep.subr.bf16.mxu0 0
        %365 = vmatpush2.bf16.xpose.msra.mxu0 0
        %366 = vmatprep.subr.bf16.mxu0 0
        %367 = vmatpush2.bf16.xpose.msra.mxu0 0
        %368 = vmatprep.subr.bf16.mxu0 0
        %369 = vmatpush2.bf16.xpose.msra.mxu0 0
        %370 = vmatprep.subr.bf16.mxu0 0
        %371 = vmatpush2.bf16.xpose.msra.mxu0 0
        %372 = vmatprep.subr.bf16.mxu0 0
        %373 = vmatpush2.bf16.xpose.msra.mxu0 0
        %374 = vmatprep.subr.bf16.mxu0 0
        %375 = vmatpush2.bf16.xpose.msra.mxu0 0
        %376 = vmatprep.subr.bf16.mxu0 0
        %377 = vmatpush2.bf16.xpose.msra.mxu0 0
        %378 = vmatprep.mubr.bf16.mxu0 0
        %379 = vmatmul.mubr.bf16.gmra.mxu0 %v341
        %v380 = vpop.f32.mrf.mxu0
        %v381 = vadd.f32 0.0, %v380
        %v382 = vpop.f32.mrf.mxu0
        %v383 = vpop.f32.mrf.mxu0
        %v384 = vpop.f32.mrf.mxu0
        %385 = vdwg.mxu0
        %v386 = vmul.f32 %v381, 0.17677669
        %vm387 = vcmask 64512
        %v388 = vsel %vm387, %v386, -inf
        %389 = vmax.xlane.f32.xlu0 %v388
        %v390 = vpop.xlane.xlu0 %389
        %v391 = vsub.f32 %v386, %v390
        %v392 = vmul.f32 %v391, 1.442695
        %v393 = vpow.pop %v392
        %v394 = vsel %vm387, %v393, 0.0
        %395 = vadd.xlane.f32.xlu0 %v394
        %v396 = vpop.xlane.xlu0 %395
        %v397 = vrcp.pop %v396
        %v398 = vmul.f32 %v393, %v397
        %v399 = vpack.c.bf16 %v398, %v398
        %v400 = vpack.c.bf16 %v337, %v337
        %v402 = vsel %vm387, %v399, 0
        %vm404 = vcmask 1043456
        %v406 = vsel %vm404, %v400, 0
        %408 = vmatprep.subr.bf16.mxu0 0
        %409 = vmatpush1.bf16.msra.mxu0 0
        %410 = vmatprep.subr.bf16.mxu0 0
        %411 = vmatpush1.bf16.msra.mxu0 0
        %412 = vmatprep.subr.bf16.mxu0 0
        %413 = vmatpush1.bf16.msra.mxu0 0
        %414 = vmatprep.subr.bf16.mxu0 0
        %415 = vmatpush1.bf16.msra.mxu0 0
        %416 = vmatprep.subr.bf16.mxu0 0
        %417 = vmatpush1.bf16.msra.mxu0 0
        %418 = vmatprep.subr.bf16.mxu0 0
        %419 = vmatpush1.bf16.msra.mxu0 0
        %420 = vmatprep.subr.bf16.mxu0 0
        %421 = vmatpush1.bf16.msra.mxu0 0
        %422 = vmatprep.subr.bf16.mxu0 0
        %423 = vmatpush1.bf16.msra.mxu0 %v406
        %424 = vmatprep.subr.bf16.mxu0 0
        %425 = vmatpush2.bf16.msra.mxu0 0
        %426 = vmatprep.subr.bf16.mxu0 0
        %427 = vmatpush2.bf16.msra.mxu0 0
        %428 = vmatprep.subr.bf16.mxu0 0
        %429 = vmatpush2.bf16.msra.mxu0 0
        %430 = vmatprep.subr.bf16.mxu0 0
        %431 = vmatpush2.bf16.msra.mxu0 0
        %432 = vmatprep.subr.bf16.mxu0 0
        %433 = vmatpush2.bf16.msra.mxu0 0
        %434 = vmatprep.subr.bf16.mxu0 0
        %435 = vmatpush2.bf16.msra.mxu0 0
        %436 = vmatprep.subr.bf16.mxu0 0
        %437 = vmatpush2.bf16.msra.mxu0 0
        %438 = vmatprep.subr.bf16.mxu0 0
        %439 = vmatpush2.bf16.msra.mxu0 0
        %440 = vmatprep.mubr.bf16.mxu0 0
        %441 = vmatmul.mubr.bf16.gmra.mxu0 %v402
        %v442 = vpop.f32.mrf.mxu0
        %v443 = vadd.f32 0.0, %v442
        %v444 = vpop.f32.mrf.mxu0
        %v445 = vpop.f32.mrf.mxu0
        %v446 = vpop.f32.mrf.mxu0
        %447 = vdwg.mxu0
        %v448 = vpack.c.bf16 %v443, %v443
        %v449 = vld [vmem:[%s1 + $0xc] sm:$0xf]
        %v450 = vld [vmem:[%s1 + $0x24] sm:$0xf]
        %v451 = vld [vmem:[%s1 + $0x3c] sm:$0xf]
        %v452 = vld [vmem:[%s1 + $0x54] sm:$0xf]
        %v453 = vld [vmem:[%s3 + $0x3] sm:$0x1]
        %v454 = vlaneseq
        %v455 = vshrl.u32 %v454, 7
        %v456 = vsub.s32 0, %v455
        %v457 = vrot.slane %v453, %v456
        %v462 = vunpack.c.l.b16 %v449
        %v463 = vunpack.c.l.b16 %v450
        %v464 = vunpack.c.l.b16 %v451
        %v465 = vunpack.c.l.b16 %v452
        %v466 = vpack.c.b16 %v463, %v462
        %v467 = vpack.c.b16 %v465, %v464
        %v471 = vsel %vm235, %v448, 0
        %473 = vmatprep.subr.bf16.mxu0 0
        %474 = vmatpush1.bf16.msra.mxu0 0
        %475 = vmatprep.subr.bf16.mxu0 0
        %476 = vmatpush1.bf16.msra.mxu0 0
        %477 = vmatprep.subr.bf16.mxu0 0
        %478 = vmatpush1.bf16.msra.mxu0 0
        %479 = vmatprep.subr.bf16.mxu0 0
        %480 = vmatpush1.bf16.msra.mxu0 0
        %481 = vmatprep.subr.bf16.mxu0 0
        %482 = vmatpush1.bf16.msra.mxu0 0
        %483 = vmatprep.subr.bf16.mxu0 0
        %484 = vmatpush1.bf16.msra.mxu0 0
        %485 = vmatprep.subr.bf16.mxu0 0
        %486 = vmatpush1.bf16.msra.mxu0 %v467
        %487 = vmatprep.subr.bf16.mxu0 0
        %488 = vmatpush1.bf16.msra.mxu0 %v466
        %489 = vmatprep.subr.bf16.mxu0 0
        %490 = vmatpush2.bf16.msra.mxu0 0
        %491 = vmatprep.subr.bf16.mxu0 0
        %492 = vmatpush2.bf16.msra.mxu0 0
        %493 = vmatprep.subr.bf16.mxu0 0
        %494 = vmatpush2.bf16.msra.mxu0 0
        %495 = vmatprep.subr.bf16.mxu0 0
        %496 = vmatpush2.bf16.msra.mxu0 0
        %497 = vmatprep.subr.bf16.mxu0 0
        %498 = vmatpush2.bf16.msra.mxu0 0
        %499 = vmatprep.subr.bf16.mxu0 0
        %500 = vmatpush2.bf16.msra.mxu0 0
        %501 = vmatprep.subr.bf16.mxu0 0
        %502 = vmatpush2.bf16.msra.mxu0 0
        %503 = vmatprep.subr.bf16.mxu0 0
        %504 = vmatpush2.bf16.msra.mxu0 0
        %505 = vmatprep.mubr.bf16.mxu0 0
        %506 = vmatmul.mubr.bf16.gmra.mxu0 %v471
        %v507 = vpop.f32.mrf.mxu0
        %v508 = vadd.f32 %v457, %v507
        %v509 = vpop.f32.mrf.mxu0
        %v510 = vpop.f32.mrf.mxu0
        %v511 = vpop.f32.mrf.mxu0
        %512 = vdwg.mxu0
        %v513 = vadd.f32 %v193, %v508
        %v514 = vsel %vm235, %v513, 0.0
        %515 = vadd.xlane.f32.xlu0 %v514
        %v516 = vpop.xlane.xlu0 %515
        %v517 = vrcp.pop 32.0
        %v518 = vmul.f32 %v516, %v517
        %v519 = vsub.f32 %v513, %v518
        %v520 = vmul.f32 %v519, %v519
        %v521 = vsel %vm235, %v520, 0.0
        %522 = vadd.xlane.f32.xlu0 %v521
        %v523 = vpop.xlane.xlu0 %522
        %v524 = vmul.f32 %v523, %v517
        %v525 = vadd.f32 %v524, 1e-05
        %v526 = vrsqrt.pop %v525
        %v527 = vmul.f32 %v519, %v526
        %v528 = vld [vmem:[%s3 + $0x4] sm:$0x1]
        %v529 = vlaneseq
        %v530 = vshrl.u32 %v529, 7
        %v531 = vsub.s32 0, %v530
        %v532 = vrot.slane %v528, %v531
        %v533 = vmul.f32 %v527, %v532
        %v534 = vld [vmem:[%s3 + $0x5] sm:$0x1]
        %v535 = vlaneseq
        %v536 = vshrl.u32 %v535, 7
        %v537 = vsub.s32 0, %v536
        %v538 = vrot.slane %v534, %v537
        %v539 = vadd.f32 %v533, %v538
        %v540 = vpack.c.bf16 %v539, %v539
        %v541 = vld [vmem:[%s1 + $0x10] sm:$0xf]
        %v542 = vld [vmem:[%s1 + $0x28] sm:$0xf]
        %v543 = vld [vmem:[%s1 + $0x40] sm:$0xf]
        %v544 = vld [vmem:[%s1 + $0x58] sm:$0xf]
        %v545 = vld [vmem:[%s3 + $0x6] sm:$0x1]
        %v546 = vlaneseq
        %v547 = vshrl.u32 %v546, 7
        %v548 = vsub.s32 0, %v547
        %v549 = vrot.slane %v545, %v548
        %v554 = vunpack.c.l.b16 %v541
        %v555 = vunpack.c.l.b16 %v542
        %v556 = vunpack.c.l.b16 %v543
        %v557 = vunpack.c.l.b16 %v544
        %v558 = vpack.c.b16 %v555, %v554
        %v559 = vpack.c.b16 %v557, %v556
        %v563 = vsel %vm235, %v540, 0
        %565 = vmatprep.subr.bf16.mxu0 0
        %566 = vmatpush1.bf16.msra.mxu0 0
        %567 = vmatprep.subr.bf16.mxu0 0
        %568 = vmatpush1.bf16.msra.mxu0 0
        %569 = vmatprep.subr.bf16.mxu0 0
        %570 = vmatpush1.bf16.msra.mxu0 0
        %571 = vmatprep.subr.bf16.mxu0 0
        %572 = vmatpush1.bf16.msra.mxu0 0
        %573 = vmatprep.subr.bf16.mxu0 0
        %574 = vmatpush1.bf16.msra.mxu0 0
        %575 = vmatprep.subr.bf16.mxu0 0
        %576 = vmatpush1.bf16.msra.mxu0 0
        %577 = vmatprep.subr.bf16.mxu0 0
        %578 = vmatpush1.bf16.msra.mxu0 %v559
        %579 = vmatprep.subr.bf16.mxu0 0
        %580 = vmatpush1.bf16.msra.mxu0 %v558
        %581 = vmatprep.subr.bf16.mxu0 0
        %582 = vmatpush2.bf16.msra.mxu0 0
        %583 = vmatprep.subr.bf16.mxu0 0
        %584 = vmatpush2.bf16.msra.mxu0 0
        %585 = vmatprep.subr.bf16.mxu0 0
        %586 = vmatpush2.bf16.msra.mxu0 0
        %587 = vmatprep.subr.bf16.mxu0 0
        %588 = vmatpush2.bf16.msra.mxu0 0
        %589 = vmatprep.subr.bf16.mxu0 0
        %590 = vmatpush2.bf16.msra.mxu0 0
        %591 = vmatprep.subr.bf16.mxu0 0
        %592 = vmatpush2.bf16.msra.mxu0 0
        %593 = vmatprep.subr.bf16.mxu0 0
        %594 = vmatpush2.bf16.msra.mxu0 0
        %595 = vmatprep.subr.bf16.mxu0 0
        %596 = vmatpush2.bf16.msra.mxu0 0
        %597 = vmatprep.mubr.bf16.mxu0 0
        %598 = vmatmul.mubr.bf16.gmra.mxu0 %v563
        %v599 = vpop.f32.mrf.mxu0
        %v600 = vadd.f32 %v549, %v599
        %v601 = vpop.f32.mrf.mxu0
        %v602 = vpop.f32.mrf.mxu0
        %v603 = vpop.f32.mrf.mxu0
        %604 = vdwg.mxu0
        %v605 = vmax.f32 %v600, 0.0
        %v606 = vpack.c.bf16 %v605, %v605
        %v607 = vld [vmem:[%s2] sm:$0xf]
        %v608 = vld [vmem:[%s2 + $0x4] sm:$0xf]
        %v609 = vld [vmem:[%s2 + $0x8] sm:$0xf]
        %v610 = vld [vmem:[%s2 + $0xc] sm:$0xf]
        %v611 = vld [vmem:[%s2 + $0x10] sm:$0xf]
        %v612 = vld [vmem:[%s2 + $0x14] sm:$0xf]
        %v613 = vld [vmem:[%s2 + $0x18] sm:$0xf]
        %v614 = vld [vmem:[%s2 + $0x1c] sm:$0xf]
        %v615 = vld [vmem:[%s2 + $0x20] sm:$0xf]
        %v616 = vld [vmem:[%s2 + $0x24] sm:$0xf]
        %v617 = vld [vmem:[%s2 + $0x28] sm:$0xf]
        %v618 = vld [vmem:[%s2 + $0x2c] sm:$0xf]
        %v619 = vld [vmem:[%s2 + $0x30] sm:$0xf]
        %v620 = vld [vmem:[%s2 + $0x34] sm:$0xf]
        %v621 = vld [vmem:[%s2 + $0x38] sm:$0xf]
        %v622 = vld [vmem:[%s2 + $0x3c] sm:$0xf]
        %v623 = vld [vmem:[%s3 + $0x7] sm:$0x1]
        %v624 = vlaneseq
        %v625 = vshrl.u32 %v624, 7
        %v626 = vsub.s32 0, %v625
        %v627 = vrot.slane %v623, %v626
        %v644 = vunpack.c.l.b16 %v607
        %v645 = vunpack.c.l.b16 %v608
        %v646 = vunpack.c.l.b16 %v609
        %v647 = vunpack.c.l.b16 %v610
        %v648 = vunpack.c.l.b16 %v611
        %v649 = vunpack.c.l.b16 %v612
        %v650 = vunpack.c.l.b16 %v613
        %v651 = vunpack.c.l.b16 %v614
        %v652 = vunpack.c.l.b16 %v615
        %v653 = vunpack.c.l.b16 %v616
        %v654 = vunpack.c.l.b16 %v617
        %v655 = vunpack.c.l.b16 %v618
        %v656 = vunpack.c.l.b16 %v619
        %v657 = vunpack.c.l.b16 %v620
        %v658 = vunpack.c.l.b16 %v621
        %v659 = vunpack.c.l.b16 %v622
        %v660 = vpack.c.b16 %v645, %v644
        %v661 = vpack.c.b16 %v647, %v646
        %v662 = vpack.c.b16 %v649, %v648
        %v663 = vpack.c.b16 %v651, %v650
        %v664 = vpack.c.b16 %v653, %v652
        %v665 = vpack.c.b16 %v655, %v654
        %v666 = vpack.c.b16 %v657, %v656
        %v667 = vpack.c.b16 %v659, %v658
        %676 = vmatprep.subr.bf16.mxu0 0
        %677 = vmatpush1.bf16.msra.mxu0 %v667
        %678 = vmatprep.subr.bf16.mxu0 0
        %679 = vmatpush1.bf16.msra.mxu0 %v666
        %680 = vmatprep.subr.bf16.mxu0 0
        %681 = vmatpush1.bf16.msra.mxu0 %v665
        %682 = vmatprep.subr.bf16.mxu0 0
        %683 = vmatpush1.bf16.msra.mxu0 %v664
        %684 = vmatprep.subr.bf16.mxu0 0
        %685 = vmatpush1.bf16.msra.mxu0 %v663
        %686 = vmatprep.subr.bf16.mxu0 0
        %687 = vmatpush1.bf16.msra.mxu0 %v662
        %688 = vmatprep.subr.bf16.mxu0 0
        %689 = vmatpush1.bf16.msra.mxu0 %v661
        %690 = vmatprep.subr.bf16.mxu0 0
        %691 = vmatpush1.bf16.msra.mxu0 %v660
        %692 = vmatprep.subr.bf16.mxu0 0
        %693 = vmatpush2.bf16.msra.mxu0 0
        %694 = vmatprep.subr.bf16.mxu0 0
        %695 = vmatpush2.bf16.msra.mxu0 0
        %696 = vmatprep.subr.bf16.mxu0 0
        %697 = vmatpush2.bf16.msra.mxu0 0
        %698 = vmatprep.subr.bf16.mxu0 0
        %699 = vmatpush2.bf16.msra.mxu0 0
        %700 = vmatprep.subr.bf16.mxu0 0
        %701 = vmatpush2.bf16.msra.mxu0 0
        %702 = vmatprep.subr.bf16.mxu0 0
        %703 = vmatpush2.bf16.msra.mxu0 0
        %704 = vmatprep.subr.bf16.mxu0 0
        %705 = vmatpush2.bf16.msra.mxu0 0
        %706 = vmatprep.subr.bf16.mxu0 0
        %707 = vmatpush2.bf16.msra.mxu0 0
        %708 = vmatprep.mubr.bf16.mxu0 0
        %709 = vmatmul.mubr.bf16.gmra.mxu0 %v606
        %v710 = vpop.f32.mrf.mxu0
        %v711 = vadd.f32 %v627, %v710
        %v712 = vpop.f32.mrf.mxu0
        %v713 = vpop.f32.mrf.mxu0
        %v714 = vpop.f32.mrf.mxu0
        %715 = vdwg.mxu0
        %v716 = vadd.f32 %v539, %v711
        %v717 = vsel %vm235, %v716, 0.0
        %718 = vadd.xlane.f32.xlu0 %v717
        %v719 = vpop.xlane.xlu0 %718
        %v720 = vmul.f32 %v719, %v517
        %v721 = vsub.f32 %v716, %v720
        %v722 = vmul.f32 %v721, %v721
        %v723 = vsel %vm235, %v722, 0.0
        %724 = vadd.xlane.f32.xlu0 %v723
        %v725 = vpop.xlane.xlu0 %724
        %v726 = vmul.f32 %v725, %v517
        %v727 = vadd.f32 %v726, 1e-05
        %v728 = vrsqrt.pop %v727
        %v729 = vmul.f32 %v721, %v728
        %v730 = vld [vmem:[%s3 + $0x8] sm:$0x1]
        %v731 = vlaneseq
        %v732 = vshrl.u32 %v731, 7
        %v733 = vsub.s32 0, %v732
        %v734 = vrot.slane %v730, %v733
        %v735 = vmul.f32 %v729, %v734
        %v736 = vld [vmem:[%s3 + $0x9] sm:$0x1]
        %v737 = vlaneseq
        %v738 = vshrl.u32 %v737, 7
        %v739 = vsub.s32 0, %v738
        %v740 = vrot.slane %v736, %v739
        %v741 = vadd.f32 %v735, %v740
        %v742 = vsel %vm235, %v741, 0.0
        %v743 = vrot.slane %v742, 4
        %v744 = vadd.f32 %v742, %v743
        %v745 = vrot.slane %v744, 2
        %v746 = vadd.f32 %v744, %v745
        %v747 = vrot.slane %v746, 1
        %v748 = vadd.f32 %v746, %v747
        %v749 = vrcp.pop 8.0
        %v750 = vmul.f32 %v748, %v749
        %v751 = vpack.c.bf16 %v750, %v750
        %v752 = vld [vmem:[%s1 + $0x14] sm:$0xf]
        %v753 = vld [vmem:[%s1 + $0x2c] sm:$0xf]
        %v754 = vld [vmem:[%s1 + $0x44] sm:$0xf]
        %v755 = vld [vmem:[%s1 + $0x5c] sm:$0xf]
        %v756 = vld [vmem:[%s3 + $0xa] sm:$0x1]
        %v761 = vunpack.c.l.b16 %v752
        %v762 = vunpack.c.l.b16 %v753
        %v763 = vunpack.c.l.b16 %v754
        %v764 = vunpack.c.l.b16 %v755
        %v765 = vpack.c.b16 %v762, %v761
        %v766 = vpack.c.b16 %v764, %v763
        %v770 = vsel %vm235, %v751, 0
        %772 = vmatprep.subr.bf16.mxu0 0
        %773 = vmatpush1.bf16.msra.mxu0 0
        %774 = vmatprep.subr.bf16.mxu0 0
        %775 = vmatpush1.bf16.msra.mxu0 0
        %776 = vmatprep.subr.bf16.mxu0 0
        %777 = vmatpush1.bf16.msra.mxu0 0
        %778 = vmatprep.subr.bf16.mxu0 0
        %779 = vmatpush1.bf16.msra.mxu0 0
        %780 = vmatprep.subr.bf16.mxu0 0
        %781 = vmatpush1.bf16.msra.mxu0 0
        %782 = vmatprep.subr.bf16.mxu0 0
        %783 = vmatpush1.bf16.msra.mxu0 0
        %784 = vmatprep.subr.bf16.mxu0 0
        %785 = vmatpush1.bf16.msra.mxu0 %v766
        %786 = vmatprep.subr.bf16.mxu0 0
        %787 = vmatpush1.bf16.msra.mxu0 %v765
        %788 = vmatprep.subr.bf16.mxu0 0
        %789 = vmatpush2.bf16.msra.mxu0 0
        %790 = vmatprep.subr.bf16.mxu0 0
        %791 = vmatpush2.bf16.msra.mxu0 0
        %792 = vmatprep.subr.bf16.mxu0 0
        %793 = vmatpush2.bf16.msra.mxu0 0
        %794 = vmatprep.subr.bf16.mxu0 0
        %795 = vmatpush2.bf16.msra.mxu0 0
        %796 = vmatprep.subr.bf16.mxu0 0
        %797 = vmatpush2.bf16.msra.mxu0 0
        %798 = vmatprep.subr.bf16.mxu0 0
        %799 = vmatpush2.bf16.msra.mxu0 0
        %800 = vmatprep.subr.bf16.mxu0 0
        %801 = vmatpush2.bf16.msra.mxu0 0
        %802 = vmatprep.subr.bf16.mxu0 0
        %803 = vmatpush2.bf16.msra.mxu0 0
        %804 = vmatprep.mubr.bf16.mxu0 0
        %805 = vmatmul.mubr.bf16.gmra.mxu0 %v770
        %v806 = vpop.f32.mrf.mxu0
        %v807 = vadd.f32 %v756, %v806
        %v808 = vpop.f32.mrf.mxu0
        %v809 = vpop.f32.mrf.mxu0
        %v810 = vpop.f32.mrf.mxu0
        %811 = vdwg.mxu0
        %812 = vst [vmem:[%s187] sm:$0x1] %v807
        %s813 = sand.u32 %s115, 1
        %s814 = scalar_lea.sflag [#allocation3], %s813
        %s815 = sand.u32 %s115, 1
        %s816 = scalar_lea.vmem [#allocation2], %s815
        // Predicated region
        $region37: #{single_cell_classifier.1} parent=35 // pred_check
          %p817 = pneg %p125
        $region38: #{single_cell_classifier.1} parent=35 // pred_check_branch
          %819 = sbr.rel (%p817) target = $region40
        $region39: #{single_cell_classifier.1} parent=35 // pred_region
          %s821 = ssub.s32 16, 16
          %822 = vsyncadd %s814, %s821
          %s823 = smul.addr %s18, 16
          %s824 = scalar_lea.hbm %s4, %s823
          %s826 = sshll.u32 %s816, 4
          %s827 = int_to_ptr.vmem [resolvable:$true] %s826
          %829 = dma.vmem_to_hbm [thread:$0]  %s827, 16, %s824, %s814
        $region40: #{single_cell_classifier.1} parent=35 // pred_fallthru
          _
      $region36: #{single_cell_classifier.1} parent=5 // pred_fallthru
        _
      %p830 = scmp.le.s32.totalorder 2, %s13
      // Predicated region
      $region41: #{single_cell_classifier.1} parent=5 // pred_check
        %p831 = pneg %p830
      $region42: #{single_cell_classifier.1} parent=5 // pred_check_branch
        %833 = sbr.rel (%p831) target = $region44
      $region43: #{single_cell_classifier.1} parent=5 // pred_region
        %s834 = ssub.s32 %s13, 2
        // Predicated region
        $region45: #{single_cell_classifier.1} parent=43 // pred_check
          %p835 = pneg %p131
        $region46: #{single_cell_classifier.1} parent=43 // pred_check_branch
          %837 = sbr.rel (%p835) target = $region48
        $region47: #{single_cell_classifier.1} parent=43 // pred_region
          %s838 = sand.u32 %s116, 1
          %s839 = scalar_lea.sflag [#allocation3], %s838
          %s840 = sand.u32 %s116, 1
          %s841 = scalar_lea.vmem [#allocation2], %s840
          %842 = dma.done %s839, 16
        $region48: #{single_cell_classifier.1} parent=43 // pred_fallthru
          _
      $region44: #{single_cell_classifier.1} parent=5 // pred_fallthru
        _
    $region6: #{single_cell_classifier.1} parent=1 // loop_footer
      %s17 = sadd.s32 1, %s13
    $region7: #{single_cell_classifier.1} parent=1 // loop_footer_branch
      %12 = sbr.rel target = $region3
    $region8: #{single_cell_classifier.1} parent=1 // loop_exit
      _
    %843 = vsyncpa [#allocation3], 1
    %s844 = scalar_lea.sflag [#allocation3], 1
    %845 = vsyncpa %s844, 1

</llo_original>
